<compile_context>
chip_gen: v7x
topology: tpu7x:2x2x1
jax: 0.10.0
libtpu: 0.0.40
codegen_flags: <defaults>
</compile_context>

<pallas_src>
import functools

import jax
import jax.numpy as jnp
from jax.experimental import pallas as pl
from jax.experimental.pallas import tpu as pltpu


def _valuenet_kernel(x_ref, w1_ref, b1_ref, w2_ref, b2_ref, w3_ref, b3_ref, o_ref,
                     *, bf16_epilogue):
    # Layer 1: (tb, D) @ (D, 512) on the MXU, bf16 operands, f32 accumulation.
    h1 = jnp.dot(x_ref[...].astype(jnp.bfloat16), w1_ref[...],
                 preferred_element_type=jnp.float32)
    if bf16_epilogue:
        # v6e/v7x: packed-bf16 bias + ReLU (half the VALU elems, half the h1 VMEM
        # traffic); the bf16 result feeds the next MXU dot directly.
        h1 = jnp.maximum(h1.astype(jnp.bfloat16) + b1_ref[...].astype(jnp.bfloat16), 0)
    else:
        # v5e (no bf16 VPU): f32 epilogue, single fused cast to bf16 for the MXU.
        h1 = jnp.maximum(h1 + b1_ref[...], 0.0).astype(jnp.bfloat16)
    # Layer 2: (tb, 512) @ (512, 256) on the MXU.
    h2 = jnp.dot(h1, w2_ref[...], preferred_element_type=jnp.float32)
    h2 = jnp.maximum(h2 + b2_ref[...], 0.0)                    # f32: feeds final reduce
    # Layer 3 (out_features == 1): VPU multiply + lane reduction instead of a
    # 1-lane-wide MXU matmul.  w3 is a (1, 256) row, b3 a scalar in SMEM.
    v = jnp.sum(h2 * w3_ref[...], axis=-1) + b3_ref[0, 0]      # (tb,) f32
    # Lane-dense store: one contiguous (1, tb) row per step (no masked 1-lane stores).
    o_ref[...] = v.reshape(1, -1).astype(o_ref.dtype)


def _pick_batch_tile(B, tb):
    """Single grid step whenever the whole batch fits one tile (the grid is a serial
    loop on single-TC parts; splitting only pays off for large batches, which then
    naturally produce a multi-step grid).  Multi-step tiles must be a multiple of 128
    so the lane-dense (1, tb) output block satisfies the (8, 128) constraint; capped
    at 2048 to keep per-step VMEM ~10-12 MB (v5e scoped default 16 MiB, v7x 64 MiB)."""
    if B <= tb:
        return B                                  # block dims == full array dims
    return max(128, min((tb // 128) * 128, 2048))


def _has_bf16_vpu():
    """v5e has no bf16 VPU -> keep the bias/ReLU epilogue in f32 there."""
    try:
        kind = jax.devices()[0].device_kind.lower()
    except Exception:
        return True
    return not any(t in kind for t in ("v5 lite", "v5lite", "v5e"))


@functools.partial(jax.jit, static_argnames=("tb", "bf16_epilogue"))
def value_net_forward(x, params, tb=1024, bf16_epilogue=True):
    """Fused MLP forward.  x: (B, state_dim) f32.  `params` must come from
    prepare_params() (W1/W2 already bf16, so no per-call convert ops).
    Returns squeeze of the (B, 1) value tensor, matching torch.squeeze."""
    w1, b1, w2, b2, w3, b3 = params
    B, D = x.shape
    tb = _pick_batch_tile(B, tb)
    grid = (pl.cdiv(B, tb),)

    flops = 2 * B * (D * 512 + 512 * 256 + 256)
    bytes_accessed = (B * D * 4                       # x (f32)
                      + (D * 512 + 512 * 256) * 2     # bf16 weights
                      + (512 + 256 + 256 + 1) * 4     # biases + w3 row (f32)
                      + B * 4)                        # output

    kernel = functools.partial(_valuenet_kernel, bf16_epilogue=bf16_epilogue)

    out = pl.pallas_call(
        kernel,
        out_shape=jax.ShapeDtypeStruct((1, B), jnp.float32),     # lane-dense output
        grid_spec=pltpu.PrefetchScalarGridSpec(
            num_scalar_prefetch=0,
            grid=grid,
            in_specs=[
                pl.BlockSpec((tb, D), lambda i: (i, 0)),            # x tile (f32)
                pl.BlockSpec((D, 512), lambda i: (0, 0)),           # W1 (bf16, full)
                pl.BlockSpec((1, 512), lambda i: (0, 0)),           # b1 (f32)
                pl.BlockSpec((512, 256), lambda i: (0, 0)),         # W2 (bf16, full)
                pl.BlockSpec((1, 256), lambda i: (0, 0)),           # b2 (f32)
                pl.BlockSpec((1, 256), lambda i: (0, 0)),           # W3 row (f32)
                pl.BlockSpec(memory_space=pltpu.MemorySpace.SMEM),  # b3 scalar
            ],
            out_specs=pl.BlockSpec((1, tb), lambda i: (0, i)),
        ),
        compiler_params=pltpu.CompilerParams(
            dimension_semantics=("parallel",),
        ),
        cost_estimate=pl.CostEstimate(
            flops=flops, bytes_accessed=bytes_accessed, transcendentals=0),
    )(x, w1, b1, w2, b2, w3, b3)

    return jnp.squeeze(out)       # (1, B) -> (B,), matches torch.squeeze on (B, 1)


def init_params(key, state_dim):
    """PyTorch nn.Linear default init: U[-1/sqrt(fan_in), 1/sqrt(fan_in)], all f32.
    Layers 1-2 stored as (in, out); layer 3 stored as a (1, 256) row for the
    in-kernel VPU multiply + lane reduction; b3 is a (1, 1) SMEM scalar."""
    def linear_init(k, fan_in, fan_out, w_shape):
        kw, kb = jax.random.split(k)
        bound = 1.0 / (fan_in ** 0.5)
        w = jax.random.uniform(kw, w_shape, jnp.float32, -bound, bound)
        b = jax.random.uniform(kb, (1, fan_out), jnp.float32, -bound, bound)
        return w, b

    k1, k2, k3 = jax.random.split(key, 3)
    w1, b1 = linear_init(k1, state_dim, 512, (state_dim, 512))
    w2, b2 = linear_init(k2, 512, 256, (512, 256))
    w3, b3 = linear_init(k3, 256, 1, (1, 256))   # row layout, b3 is (1, 1)
    return (w1, b1, w2, b2, w3, b3)


def prepare_params(params):
    """One-time conversion of the MXU weights to bf16, hoisted out of the forward
    so no per-call convert ops (and their HBM traffic) are launched."""
    w1, b1, w2, b2, w3, b3 = params
    return (jnp.asarray(w1, jnp.bfloat16), b1,
            jnp.asarray(w2, jnp.bfloat16), b2, w3, b3)


def _reference(x, params):
    w1, b1, w2, b2, w3, b3 = params
    h1 = jnp.maximum(x @ w1 + b1, 0.0)
    h2 = jnp.maximum(h1 @ w2 + b2, 0.0)
    return jnp.squeeze(h2 @ w3.T + b3)           # w3 is a (1, 256) row


if __name__ == "__main__":
    key = jax.random.PRNGKey(0)
    state_dim = 32

    kx, kp = jax.random.split(key)
    params_f32 = init_params(kp, state_dim)
    params = jax.block_until_ready(prepare_params(params_f32))   # one-time bf16 prep
    bf16_ep = _has_bf16_vpu()

    # Even batch (single full block), ragged batch (full-dim block, no padding copy),
    # and a larger ragged batch with tb=128 to exercise a multi-step grid + masked
    # partial last block on the lane-dense output.
    for batch, tb in ((16, 1024), (13, 1024), (300, 128)):
        x = jax.random.normal(jax.random.fold_in(kx, batch),
                              (batch, state_dim), dtype=jnp.float32)
        out = jax.block_until_ready(
            value_net_forward(x, params, tb=tb, bf16_epilogue=bf16_ep))
        ref = _reference(x, params_f32)
        assert out.shape == (batch,), out.shape
        # bf16 MXU operands (f32 accumulation) => loosen tolerance vs. pure-f32 reference.
        assert jnp.allclose(out, ref, atol=3e-2, rtol=3e-2), (out, ref)

    print("KERNEL_OK")
</pallas_src>

<mosaic_0001>
module attributes {stable_mosaic.version = 11 : i64} {
  func.func @_valuenet_kernel(%arg0: i32, %arg1: memref<16x32xf32, #tpu.memory_space<vmem>>, %arg2: memref<32x512xbf16, #tpu.memory_space<vmem>>, %arg3: memref<1x512xf32, #tpu.memory_space<vmem>>, %arg4: memref<512x256xbf16, #tpu.memory_space<vmem>>, %arg5: memref<1x256xf32, #tpu.memory_space<vmem>>, %arg6: memref<1x256xf32, #tpu.memory_space<vmem>>, %arg7: memref<1x1xf32, #tpu.memory_space<smem>>, %arg8: memref<1x16xf32, #tpu.memory_space<vmem>>) attributes {dimension_semantics = [#tpu.dimension_semantics<parallel>], iteration_bounds = array<i64: 1>, scalar_prefetch = 0 : i64, scratch_operands = 0 : i64, tpu.core_type = #tpu.core_type<tc>, window_params = [{transform_indices = @transform_0, window_bounds = array<i64: 16, 32>}, {pipeline_mode = #tpu.pipeline_mode<synchronous>, transform_indices = @transform_1, window_bounds = array<i64: 32, 512>}, {pipeline_mode = #tpu.pipeline_mode<synchronous>, transform_indices = @transform_2, window_bounds = array<i64: 1, 512>}, {pipeline_mode = #tpu.pipeline_mode<synchronous>, transform_indices = @transform_3, window_bounds = array<i64: 512, 256>}, {pipeline_mode = #tpu.pipeline_mode<synchronous>, transform_indices = @transform_4, window_bounds = array<i64: 1, 256>}, {pipeline_mode = #tpu.pipeline_mode<synchronous>, transform_indices = @transform_5, window_bounds = array<i64: 1, 256>}, {transform_indices = @transform_6, window_bounds = array<i64: 1, 1>}, {transform_indices = @transform_7, window_bounds = array<i64: 1, 16>}]} {
    %c0 = arith.constant 0 : index
    %c0_0 = arith.constant 0 : index
    %0 = vector.load %arg1[%c0, %c0_0] : memref<16x32xf32, #tpu.memory_space<vmem>>, vector<16x32xf32>
    %1 = arith.truncf %0 : vector<16x32xf32> to vector<16x32xbf16>
    %c0_1 = arith.constant 0 : index
    %c0_2 = arith.constant 0 : index
    %2 = vector.load %arg2[%c0_1, %c0_2] : memref<32x512xbf16, #tpu.memory_space<vmem>>, vector<32x512xbf16>
    %cst = arith.constant dense<0.000000e+00> : vector<16x512xf32>
    %3 = tpu.matmul %1, %2, %cst {dimension_numbers = #tpu.dot_dimension_numbers<[1], [0], [0], [1], [0, 0, 1, 1], [], []>} : vector<16x32xbf16>, vector<32x512xbf16>, vector<16x512xf32> -> vector<16x512xf32>
    %4 = arith.truncf %3 : vector<16x512xf32> to vector<16x512xbf16>
    %c0_3 = arith.constant 0 : index
    %c0_4 = arith.constant 0 : index
    %5 = vector.load %arg3[%c0_3, %c0_4] : memref<1x512xf32, #tpu.memory_space<vmem>>, vector<1x512xf32>
    %6 = arith.truncf %5 : vector<1x512xf32> to vector<1x512xbf16>
    %7 = vector.broadcast %6 : vector<1x512xbf16> to vector<16x512xbf16>
    %8 = arith.addf %4, %7 : vector<16x512xbf16>
    %cst_5 = arith.constant 0.000000e+00 : bf16
    %9 = vector.broadcast %cst_5 : bf16 to vector<16x512xbf16>
    %10 = arith.maximumf %8, %9 : vector<16x512xbf16>
    %c0_6 = arith.constant 0 : index
    %c0_7 = arith.constant 0 : index
    %11 = vector.load %arg4[%c0_6, %c0_7] : memref<512x256xbf16, #tpu.memory_space<vmem>>, vector<512x256xbf16>
    %cst_8 = arith.constant dense<0.000000e+00> : vector<16x256xf32>
    %12 = tpu.matmul %10, %11, %cst_8 {dimension_numbers = #tpu.dot_dimension_numbers<[1], [0], [0], [1], [0, 0, 1, 1], [], []>} : vector<16x512xbf16>, vector<512x256xbf16>, vector<16x256xf32> -> vector<16x256xf32>
    %c0_9 = arith.constant 0 : index
    %c0_10 = arith.constant 0 : index
    %13 = vector.load %arg5[%c0_9, %c0_10] : memref<1x256xf32, #tpu.memory_space<vmem>>, vector<1x256xf32>
    %14 = vector.broadcast %13 : vector<1x256xf32> to vector<16x256xf32>
    %15 = arith.addf %12, %14 : vector<16x256xf32>
    %cst_11 = arith.constant 0.000000e+00 : f32
    %16 = vector.broadcast %cst_11 : f32 to vector<16x256xf32>
    %17 = arith.maximumf %15, %16 : vector<16x256xf32>
    %c0_12 = arith.constant 0 : index
    %c0_13 = arith.constant 0 : index
    %18 = vector.load %arg6[%c0_12, %c0_13] : memref<1x256xf32, #tpu.memory_space<vmem>>, vector<1x256xf32>
    %19 = vector.broadcast %18 : vector<1x256xf32> to vector<16x256xf32>
    %20 = arith.mulf %17, %19 : vector<16x256xf32>
    %cst_14 = arith.constant dense<0.000000e+00> : vector<16xf32>
    %21 = vector.multi_reduction <add>, %20, %cst_14 [1] : vector<16x256xf32> to vector<16xf32>
    %c0_15 = arith.constant 0 : index
    %c0_16 = arith.constant 0 : index
    %22 = memref.load %arg7[%c0_15, %c0_16] : memref<1x1xf32, #tpu.memory_space<smem>>
    %23 = vector.broadcast %22 : f32 to vector<16xf32>
    %24 = arith.addf %21, %23 : vector<16xf32>
    %25 = vector.shape_cast %24 : vector<16xf32> to vector<1x16xf32>
    %c0_17 = arith.constant 0 : index
    %c0_18 = arith.constant 0 : index
    %26 = vector.load %arg8[%c0_17, %c0_18] : memref<1x16xf32, #tpu.memory_space<vmem>>, vector<1x16xf32>
    tpu.vector_store %arg8[%c0_17, %c0_18], %25 {strides = array<i32>} : memref<1x16xf32, #tpu.memory_space<vmem>>, vector<1x16xf32>,
    return
  }
  func.func @transform_0(%arg0: i32) -> (i32, i32) {
    %c0_i32 = arith.constant 0 : i32
    %c0_i32_0 = arith.constant 0 : i32
    return %arg0, %c0_i32 : i32, i32
  }
  func.func @transform_1(%arg0: i32) -> (i32, i32) {
    %c0_i32 = arith.constant 0 : i32
    %c0_i32_0 = arith.constant 0 : i32
    %c0_i32_1 = arith.constant 0 : i32
    return %c0_i32, %c0_i32_0 : i32, i32
  }
  func.func @transform_2(%arg0: i32) -> (i32, i32) {
    %c0_i32 = arith.constant 0 : i32
    %c0_i32_0 = arith.constant 0 : i32
    %c0_i32_1 = arith.constant 0 : i32
    return %c0_i32, %c0_i32_0 : i32, i32
  }
  func.func @transform_3(%arg0: i32) -> (i32, i32) {
    %c0_i32 = arith.constant 0 : i32
    %c0_i32_0 = arith.constant 0 : i32
    %c0_i32_1 = arith.constant 0 : i32
    return %c0_i32, %c0_i32_0 : i32, i32
  }
  func.func @transform_4(%arg0: i32) -> (i32, i32) {
    %c0_i32 = arith.constant 0 : i32
    %c0_i32_0 = arith.constant 0 : i32
    %c0_i32_1 = arith.constant 0 : i32
    return %c0_i32, %c0_i32_0 : i32, i32
  }
  func.func @transform_5(%arg0: i32) -> (i32, i32) {
    %c0_i32 = arith.constant 0 : i32
    %c0_i32_0 = arith.constant 0 : i32
    %c0_i32_1 = arith.constant 0 : i32
    return %c0_i32, %c0_i32_0 : i32, i32
  }
  func.func @transform_6(%arg0: i32) -> (i32, i32) {
    %c0_i32 = arith.constant 0 : i32
    %c0_i32_0 = arith.constant 0 : i32
    %c0_i32_1 = arith.constant 0 : i32
    return %c0_i32, %c0_i32_0 : i32, i32
  }
  func.func @transform_7(%arg0: i32) -> (i32, i32) {
    %c0_i32 = arith.constant 0 : i32
    %c0_i32_0 = arith.constant 0 : i32
    return %c0_i32, %arg0 : i32, i32
  }
}

</mosaic_0001>

<llo_original>
// kernel: value_net_forward.1
$region0: #{value_net_forward.1}
  #allocation0 [shape = 'u32[]', space=smem, size = 0x4, offset = 0x4, fixed_abs, tag = 'smem constant byte address 0x4 - core index']
  #allocation1 [shape = 'u32[144,128]{1,0:T(1,128)}', space=vmem, size = 0x12000, scoped, tag = 'internal scratch']
  #allocation2 [shape = 'f32[1,1]{1,0:T(1,128)S(6)}', space=smem, size = 0x200, scoped, tag = 'scoped memory for value_net_forward.1']
  %s0 = inlined_call_operand.hbm [shape: f32[16,32], index: 0, kind: input, shape index: {}]
  %s1 = inlined_call_operand.hbm [shape: bf16[32,512], index: 1, kind: input, shape index: {}]
  %s2 = inlined_call_operand.vmem [shape: f32[1,512], index: 2, kind: input, shape index: {}]
  %s3 = inlined_call_operand.hbm [shape: bf16[512,256], index: 3, kind: input, shape index: {}]
  %s4 = inlined_call_operand.vmem [shape: f32[1,256], index: 4, kind: input, shape index: {}]
  %s5 = inlined_call_operand.vmem [shape: f32[1,256], index: 5, kind: input, shape index: {}]
  %s6 = inlined_call_operand.<no memory space> [shape: f32[1,1], index: 6, kind: input, shape index: {}]
  %s7 = inlined_call_operand.hbm [shape: f32[1,16], index: 7, kind: output, shape index: {}]
  %s8 = sld [smem:[#allocation0]]
  $region50: #{value_net_forward.1} parent=0
    _
  %s10 = ssub.s32 1, %s8
  %s11 = scalar_select 0, %s10, %s8
  %12 = sst [smem:[#allocation2]] %s6
  $region1: #{value_net_forward.1} parent=0
    #allocation3 [shape = 'u8[8192]{0}', space=vmem, size = 0x2000, scoped, tag = 'input window, operand 0, single buffered']
    #allocation4 [shape = 's32[1]{0}', space=sflag, size = 0x4, scoped, tag = 'scoped memory for value_net_forward.1']
    #allocation5 [shape = 's32[1]{0}', space=sflag, size = 0x4, scoped, tag = 'scoped memory for value_net_forward.1']
    #allocation6 [shape = 'u8[32768]{0}', space=vmem, size = 0x8000, scoped, tag = 'input window, operand 1, single buffered']
    #allocation7 [shape = 's32[1]{0}', space=sflag, size = 0x4, scoped, tag = 'scoped memory for value_net_forward.1']
    #allocation8 [shape = 'u8[262144]{0}', space=vmem, size = 0x40000, scoped, tag = 'input window, operand 3, single buffered']
    #allocation9 [shape = 'u8[512]{0}', space=vmem, size = 0x400, scoped, tag = 'output window, operand 0, single buffered']
    %13 = vsyncpa [#allocation4], 0
    %14 = vsyncpa [#allocation7], 0
    %15 = vsyncpa [#allocation5], 0
    // Predicated region
    $region2: #{value_net_forward.1} parent=1 // pred_check
      _
    $region3: #{value_net_forward.1} parent=1 // pred_check_branch
      %17 = sbr.rel (0) target = $region5
    $region4: #{value_net_forward.1} parent=1 // pred_region
      %s19 = ssub.s32 256, 256
      %20 = vsyncadd [#allocation4], %s19
      %s21 = sshll.u32 [#allocation3], 4
      %s22 = int_to_ptr.vmem [resolvable:$true] %s21
      %27 = dma.hbm_to_vmem [thread:$0]  %s0, 256, %s22, [#allocation4], 128, 128, 8
    $region5: #{value_net_forward.1} parent=1 // pred_fallthru
      _
    // Predicated region
    $region6: #{value_net_forward.1} parent=1 // pred_check
      _
    $region7: #{value_net_forward.1} parent=1 // pred_check_branch
      %29 = sbr.rel (0) target = $region9
    $region8: #{value_net_forward.1} parent=1 // pred_region
      %s31 = ssub.s32 1024, 1024
      %32 = vsyncadd [#allocation7], %s31
      %s33 = sshll.u32 [#allocation6], 4
      %s34 = int_to_ptr.vmem [resolvable:$true] %s33
      %39 = dma.hbm_to_vmem [thread:$0]  %s1, 1024, %s34, [#allocation7], 256, 256, 16
    $region9: #{value_net_forward.1} parent=1 // pred_fallthru
      _
    // Predicated region
    $region10: #{value_net_forward.1} parent=1 // pred_check
      _
    $region11: #{value_net_forward.1} parent=1 // pred_check_branch
      %41 = sbr.rel (0) target = $region13
    $region12: #{value_net_forward.1} parent=1 // pred_region
      _
    $region13: #{value_net_forward.1} parent=1 // pred_fallthru
      _
    // Predicated region
    $region14: #{value_net_forward.1} parent=1 // pred_check
      _
    $region15: #{value_net_forward.1} parent=1 // pred_check_branch
      %43 = sbr.rel (0) target = $region17
    $region16: #{value_net_forward.1} parent=1 // pred_region
      %s45 = ssub.s32 8192, 8192
      %46 = vsyncadd [#allocation7], %s45
      %s47 = sshll.u32 [#allocation8], 4
      %s48 = int_to_ptr.vmem [resolvable:$true] %s47
      %53 = dma.hbm_to_vmem [thread:$0]  %s3, 8192, %s48, [#allocation7], 128, 128, 8
    $region17: #{value_net_forward.1} parent=1 // pred_fallthru
      _
    // Predicated region
    $region18: #{value_net_forward.1} parent=1 // pred_check
      _
    $region19: #{value_net_forward.1} parent=1 // pred_check_branch
      %55 = sbr.rel (0) target = $region21
    $region20: #{value_net_forward.1} parent=1 // pred_region
      _
    $region21: #{value_net_forward.1} parent=1 // pred_fallthru
      _
    // Predicated region
    $region22: #{value_net_forward.1} parent=1 // pred_check
      _
    $region23: #{value_net_forward.1} parent=1 // pred_check_branch
      %57 = sbr.rel (0) target = $region25
    $region24: #{value_net_forward.1} parent=1 // pred_region
      _
    $region25: #{value_net_forward.1} parent=1 // pred_fallthru
      _
    // Predicated region
    $region26: #{value_net_forward.1} parent=1 // pred_check
      _
    $region27: #{value_net_forward.1} parent=1 // pred_check_branch
      %59 = sbr.rel (0) target = $region29
    $region28: #{value_net_forward.1} parent=1 // pred_region
      _
    $region29: #{value_net_forward.1} parent=1 // pred_fallthru
      _
    // Predicated region
    $region30: #{value_net_forward.1} parent=1 // pred_check
      _
    $region31: #{value_net_forward.1} parent=1 // pred_check_branch
      %61 = sbr.rel (0) target = $region33
    $region32: #{value_net_forward.1} parent=1 // pred_region
      %62 = dma.done [#allocation4], 256
    $region33: #{value_net_forward.1} parent=1 // pred_fallthru
      _
    // Predicated region
    $region34: #{value_net_forward.1} parent=1 // pred_check
      _
    $region35: #{value_net_forward.1} parent=1 // pred_check_branch
      %64 = sbr.rel (0) target = $region37
    $region36: #{value_net_forward.1} parent=1 // pred_region
      %65 = dma.done [#allocation7], 1024
    $region37: #{value_net_forward.1} parent=1 // pred_fallthru
      _
    // Predicated region
    $region38: #{value_net_forward.1} parent=1 // pred_check
      _
    $region39: #{value_net_forward.1} parent=1 // pred_check_branch
      %67 = sbr.rel (0) target = $region41
    $region40: #{value_net_forward.1} parent=1 // pred_region
      %68 = dma.done [#allocation7], 8192
    $region41: #{value_net_forward.1} parent=1 // pred_fallthru
      _
    %v70 = vld [vmem:[#allocation3] sm:$0xff]
    %v71 = vld [vmem:[#allocation3 + $0x8] sm:$0xff]
    %v72 = vpack.c.bf16 %v71, %v70
    %v73 = vld [vmem:[#allocation6] sm:$0xff]
    %v74 = vld [vmem:[#allocation6 + $0x8] sm:$0xff]
    %v75 = vld [vmem:[#allocation6 + $0x10] sm:$0xff]
    %v76 = vld [vmem:[#allocation6 + $0x18] sm:$0xff]
    %v77 = vld [vmem:[#allocation6 + $0x20] sm:$0xff]
    %v78 = vld [vmem:[#allocation6 + $0x28] sm:$0xff]
    %v79 = vld [vmem:[#allocation6 + $0x30] sm:$0xff]
    %v80 = vld [vmem:[#allocation6 + $0x38] sm:$0xff]
    %v89 = vunpack.c.l.b16 %v73
    %v90 = vunpack.c.h.b16 %v73
    %v91 = vunpack.c.l.b16 %v74
    %v92 = vunpack.c.h.b16 %v74
    %v93 = vunpack.c.l.b16 %v75
    %v94 = vunpack.c.h.b16 %v75
    %v95 = vunpack.c.l.b16 %v76
    %v96 = vunpack.c.h.b16 %v76
    %v97 = vunpack.c.l.b16 %v77
    %v98 = vunpack.c.h.b16 %v77
    %v99 = vunpack.c.l.b16 %v78
    %v100 = vunpack.c.h.b16 %v78
    %v101 = vunpack.c.l.b16 %v79
    %v102 = vunpack.c.h.b16 %v79
    %v103 = vunpack.c.l.b16 %v80
    %v104 = vunpack.c.h.b16 %v80
    %v105 = vpack.c.b16 %v93, %v89
    %v106 = vpack.c.b16 %v94, %v90
    %v107 = vpack.c.b16 %v95, %v91
    %v108 = vpack.c.b16 %v96, %v92
    %v109 = vpack.c.b16 %v101, %v97
    %v110 = vpack.c.b16 %v102, %v98
    %v111 = vpack.c.b16 %v103, %v99
    %v112 = vpack.c.b16 %v104, %v100
    %vm121 = vcmask 261120
    %v123 = vsel %vm121, %v72, 0
    %125 = vmatprep.subr.bf16.mxu0 %v106
    %126 = vmatpush1.bf16.msra.mxu0 %v105
    %127 = vmatprep.subr.bf16.mxu0 %v110
    %128 = vmatpush1.bf16.msra.mxu0 %v109
    %129 = vmatprep.subr.bf16.mxu0 0
    %130 = vmatpush1.bf16.msra.mxu0 0
    %131 = vmatprep.subr.bf16.mxu0 0
    %132 = vmatpush1.bf16.msra.mxu0 0
    %133 = vmatprep.subr.bf16.mxu0 0
    %134 = vmatpush1.bf16.msra.mxu0 0
    %135 = vmatprep.subr.bf16.mxu0 0
    %136 = vmatpush1.bf16.msra.mxu0 0
    %137 = vmatprep.subr.bf16.mxu0 0
    %138 = vmatpush1.bf16.msra.mxu0 0
    %139 = vmatprep.subr.bf16.mxu0 0
    %140 = vmatpush1.bf16.msra.mxu0 0
    %141 = vmatprep.subr.bf16.mxu0 0
    %142 = vmatpush1.bf16.msra.mxu0 0
    %143 = vmatprep.subr.bf16.mxu0 0
    %144 = vmatpush1.bf16.msra.mxu0 0
    %145 = vmatprep.subr.bf16.mxu0 0
    %146 = vmatpush1.bf16.msra.mxu0 0
    %147 = vmatprep.subr.bf16.mxu0 0
    %148 = vmatpush1.bf16.msra.mxu0 0
    %149 = vmatprep.subr.bf16.mxu0 0
    %150 = vmatpush1.bf16.msra.mxu0 0
    %151 = vmatprep.subr.bf16.mxu0 0
    %152 = vmatpush1.bf16.msra.mxu0 0
    %153 = vmatprep.subr.bf16.mxu0 0
    %154 = vmatpush1.bf16.msra.mxu0 0
    %155 = vmatprep.subr.bf16.mxu0 0
    %156 = vmatpush1.bf16.msra.mxu0 0
    %157 = vmatprep.mubr.bf16.mxu0 0
    %158 = vmatmul.mubr.bf16.gmra.mrb[0].mxu0 %v123
    %v159 = vpop.f32.mrb[0].mxu0
    %v160 = vadd.f32 0.0, %v159
    %v161 = vpop.f32.mrb[0].mxu0
    %v162 = vadd.f32 0.0, %v161
    %v163 = vpop.f32.mrb[0].mxu0
    %v164 = vadd.f32 0.0, %v163
    %v165 = vpop.f32.mrb[0].mxu0
    %v166 = vadd.f32 0.0, %v165
    %167 = vdwg.mxu0
    %168 = vmatprep.subr.bf16.mxu0 %v108
    %169 = vmatpush1.bf16.msra.mxu0 %v107
    %170 = vmatprep.subr.bf16.mxu0 %v112
    %171 = vmatpush1.bf16.msra.mxu0 %v111
    %172 = vmatprep.subr.bf16.mxu0 0
    %173 = vmatpush1.bf16.msra.mxu0 0
    %174 = vmatprep.subr.bf16.mxu0 0
    %175 = vmatpush1.bf16.msra.mxu0 0
    %176 = vmatprep.subr.bf16.mxu0 0
    %177 = vmatpush1.bf16.msra.mxu0 0
    %178 = vmatprep.subr.bf16.mxu0 0
    %179 = vmatpush1.bf16.msra.mxu0 0
    %180 = vmatprep.subr.bf16.mxu0 0
    %181 = vmatpush1.bf16.msra.mxu0 0
    %182 = vmatprep.subr.bf16.mxu0 0
    %183 = vmatpush1.bf16.msra.mxu0 0
    %184 = vmatprep.subr.bf16.mxu0 0
    %185 = vmatpush1.bf16.msra.mxu0 0
    %186 = vmatprep.subr.bf16.mxu0 0
    %187 = vmatpush1.bf16.msra.mxu0 0
    %188 = vmatprep.subr.bf16.mxu0 0
    %189 = vmatpush1.bf16.msra.mxu0 0
    %190 = vmatprep.subr.bf16.mxu0 0
    %191 = vmatpush1.bf16.msra.mxu0 0
    %192 = vmatprep.subr.bf16.mxu0 0
    %193 = vmatpush1.bf16.msra.mxu0 0
    %194 = vmatprep.subr.bf16.mxu0 0
    %195 = vmatpush1.bf16.msra.mxu0 0
    %196 = vmatprep.subr.bf16.mxu0 0
    %197 = vmatpush1.bf16.msra.mxu0 0
    %198 = vmatprep.subr.bf16.mxu0 0
    %199 = vmatpush1.bf16.msra.mxu0 0
    %200 = vmatprep.mubr.bf16.mxu0 0
    %201 = vmatmul.mubr.bf16.gmra.mrb[0].mxu0 %v123
    %v202 = vpop.f32.mrb[0].mxu0
    %v203 = vadd.f32 0.0, %v202
    %v204 = vpop.f32.mrb[0].mxu0
    %v205 = vadd.f32 0.0, %v204
    %v206 = vpop.f32.mrb[0].mxu0
    %v207 = vadd.f32 0.0, %v206
    %v208 = vpop.f32.mrb[0].mxu0
    %v209 = vadd.f32 0.0, %v208
    %210 = vdwg.mxu0
    %v211 = vpack.c.bf16 %v164, %v160
    %v212 = vpack.c.bf16 %v166, %v162
    %v213 = vpack.c.bf16 %v207, %v203
    %v214 = vpack.c.bf16 %v209, %v205
    %v215 = vld [vmem:[%s2] sm:$0xf]
    %v217 = vlaneseq
    %v218 = vshrl.u32 %v217, 7
    %v219 = vsub.s32 0, %v218
    %v220 = vrot.slane %v215, %v219
    %v221 = vlaneseq
    %v222 = vshrl.u32 %v221, 7
    %v223 = vsub.s32 1, %v222
    %v224 = vrot.slane %v215, %v223
    %v225 = vlaneseq
    %v226 = vshrl.u32 %v225, 7
    %v227 = vsub.s32 2, %v226
    %v228 = vrot.slane %v215, %v227
    %v229 = vlaneseq
    %v230 = vshrl.u32 %v229, 7
    %v231 = vsub.s32 3, %v230
    %v232 = vrot.slane %v215, %v231
    %v237 = vpack.c.bf16 %v220, %v220
    %v238 = vpack.c.bf16 %v224, %v224
    %v239 = vpack.c.bf16 %v228, %v228
    %v240 = vpack.c.bf16 %v232, %v232
    %v242 = vpack.i.b16 %v237, %v237
    %v244 = vlaneseq
    %v245 = vshrl.u32 %v244, 7
    %v246 = vsub.s32 0, %v245
    %v247 = vrot.slane %v242, %v246
    %v249 = vpack.i.b16 %v238, %v238
    %v251 = vlaneseq
    %v252 = vshrl.u32 %v251, 7
    %v253 = vsub.s32 0, %v252
    %v254 = vrot.slane %v249, %v253
    %v256 = vpack.i.b16 %v239, %v239
    %v258 = vlaneseq
    %v259 = vshrl.u32 %v258, 7
    %v260 = vsub.s32 0, %v259
    %v261 = vrot.slane %v256, %v260
    %v263 = vpack.i.b16 %v240, %v240
    %v265 = vlaneseq
    %v266 = vshrl.u32 %v265, 7
    %v267 = vsub.s32 0, %v266
    %v268 = vrot.slane %v263, %v267
    %v269 = vadd.bf16 %v211, %v247
    %v270 = vadd.bf16 %v212, %v254
    %v271 = vadd.bf16 %v213, %v261
    %v272 = vadd.bf16 %v214, %v268
    %v273 = vmax.bf16 %v269, 0
    %v274 = vmax.bf16 %v270, 0
    %v275 = vmax.bf16 %v271, 0
    %v276 = vmax.bf16 %v272, 0
    %v277 = vld [vmem:[#allocation8] sm:$0xff]
    %v278 = vld [vmem:[#allocation8 + $0x8] sm:$0xff]
    %v279 = vld [vmem:[#allocation8 + $0x10] sm:$0xff]
    %v280 = vld [vmem:[#allocation8 + $0x18] sm:$0xff]
    %v281 = vld [vmem:[#allocation8 + $0x20] sm:$0xff]
    %v282 = vld [vmem:[#allocation8 + $0x28] sm:$0xff]
    %v283 = vld [vmem:[#allocation8 + $0x30] sm:$0xff]
    %v284 = vld [vmem:[#allocation8 + $0x38] sm:$0xff]
    %v285 = vld [vmem:[#allocation8 + $0x40] sm:$0xff]
    %v286 = vld [vmem:[#allocation8 + $0x48] sm:$0xff]
    %v287 = vld [vmem:[#allocation8 + $0x50] sm:$0xff]
    %v288 = vld [vmem:[#allocation8 + $0x58] sm:$0xff]
    %v289 = vld [vmem:[#allocation8 + $0x60] sm:$0xff]
    %v290 = vld [vmem:[#allocation8 + $0x68] sm:$0xff]
    %v291 = vld [vmem:[#allocation8 + $0x70] sm:$0xff]
    %v292 = vld [vmem:[#allocation8 + $0x78] sm:$0xff]
    %v293 = vld [vmem:[#allocation8 + $0x80] sm:$0xff]
    %v294 = vld [vmem:[#allocation8 + $0x88] sm:$0xff]
    %v295 = vld [vmem:[#allocation8 + $0x90] sm:$0xff]
    %v296 = vld [vmem:[#allocation8 + $0x98] sm:$0xff]
    %v297 = vld [vmem:[#allocation8 + $0xa0] sm:$0xff]
    %v298 = vld [vmem:[#allocation8 + $0xa8] sm:$0xff]
    %v299 = vld [vmem:[#allocation8 + $0xb0] sm:$0xff]
    %v300 = vld [vmem:[#allocation8 + $0xb8] sm:$0xff]
    %v301 = vld [vmem:[#allocation8 + $0xc0] sm:$0xff]
    %v302 = vld [vmem:[#allocation8 + $0xc8] sm:$0xff]
    %v303 = vld [vmem:[#allocation8 + $0xd0] sm:$0xff]
    %v304 = vld [vmem:[#allocation8 + $0xd8] sm:$0xff]
    %v305 = vld [vmem:[#allocation8 + $0xe0] sm:$0xff]
    %v306 = vld [vmem:[#allocation8 + $0xe8] sm:$0xff]
    %v307 = vld [vmem:[#allocation8 + $0xf0] sm:$0xff]
    %v308 = vld [vmem:[#allocation8 + $0xf8] sm:$0xff]
    %v309 = vld [vmem:[#allocation8 + $0x100] sm:$0xff]
    %v310 = vld [vmem:[#allocation8 + $0x108] sm:$0xff]
    %v311 = vld [vmem:[#allocation8 + $0x110] sm:$0xff]
    %v312 = vld [vmem:[#allocation8 + $0x118] sm:$0xff]
    %v313 = vld [vmem:[#allocation8 + $0x120] sm:$0xff]
    %v314 = vld [vmem:[#allocation8 + $0x128] sm:$0xff]
    %v315 = vld [vmem:[#allocation8 + $0x130] sm:$0xff]
    %v316 = vld [vmem:[#allocation8 + $0x138] sm:$0xff]
    %v317 = vld [vmem:[#allocation8 + $0x140] sm:$0xff]
    %v318 = vld [vmem:[#allocation8 + $0x148] sm:$0xff]
    %v319 = vld [vmem:[#allocation8 + $0x150] sm:$0xff]
    %v320 = vld [vmem:[#allocation8 + $0x158] sm:$0xff]
    %v321 = vld [vmem:[#allocation8 + $0x160] sm:$0xff]
    %v322 = vld [vmem:[#allocation8 + $0x168] sm:$0xff]
    %v323 = vld [vmem:[#allocation8 + $0x170] sm:$0xff]
    %v324 = vld [vmem:[#allocation8 + $0x178] sm:$0xff]
    %v325 = vld [vmem:[#allocation8 + $0x180] sm:$0xff]
    %v326 = vld [vmem:[#allocation8 + $0x188] sm:$0xff]
    %v327 = vld [vmem:[#allocation8 + $0x190] sm:$0xff]
    %v328 = vld [vmem:[#allocation8 + $0x198] sm:$0xff]
    %v329 = vld [vmem:[#allocation8 + $0x1a0] sm:$0xff]
    %v330 = vld [vmem:[#allocation8 + $0x1a8] sm:$0xff]
    %v331 = vld [vmem:[#allocation8 + $0x1b0] sm:$0xff]
    %v332 = vld [vmem:[#allocation8 + $0x1b8] sm:$0xff]
    %v333 = vld [vmem:[#allocation8 + $0x1c0] sm:$0xff]
    %v334 = vld [vmem:[#allocation8 + $0x1c8] sm:$0xff]
    %v335 = vld [vmem:[#allocation8 + $0x1d0] sm:$0xff]
    %v336 = vld [vmem:[#allocation8 + $0x1d8] sm:$0xff]
    %v337 = vld [vmem:[#allocation8 + $0x1e0] sm:$0xff]
    %v338 = vld [vmem:[#allocation8 + $0x1e8] sm:$0xff]
    %v339 = vld [vmem:[#allocation8 + $0x1f0] sm:$0xff]
    %v340 = vld [vmem:[#allocation8 + $0x1f8] sm:$0xff]
    %v341 = vld [vmem:[%s4] sm:$0x3]
    %v343 = vlaneseq
    %v344 = vshrl.u32 %v343, 7
    %v345 = vsub.s32 0, %v344
    %v346 = vrot.slane %v341, %v345
    %v347 = vlaneseq
    %v348 = vshrl.u32 %v347, 7
    %v349 = vsub.s32 1, %v348
    %v350 = vrot.slane %v341, %v349
    %v417 = vunpack.c.l.b16 %v277
    %v418 = vunpack.c.h.b16 %v277
    %v419 = vunpack.c.l.b16 %v278
    %v420 = vunpack.c.h.b16 %v278
    %v421 = vunpack.c.l.b16 %v279
    %v422 = vunpack.c.h.b16 %v279
    %v423 = vunpack.c.l.b16 %v280
    %v424 = vunpack.c.h.b16 %v280
    %v425 = vunpack.c.l.b16 %v281
    %v426 = vunpack.c.h.b16 %v281
    %v427 = vunpack.c.l.b16 %v282
    %v428 = vunpack.c.h.b16 %v282
    %v429 = vunpack.c.l.b16 %v283
    %v430 = vunpack.c.h.b16 %v283
    %v431 = vunpack.c.l.b16 %v284
    %v432 = vunpack.c.h.b16 %v284
    %v433 = vunpack.c.l.b16 %v285
    %v434 = vunpack.c.h.b16 %v285
    %v435 = vunpack.c.l.b16 %v286
    %v436 = vunpack.c.h.b16 %v286
    %v437 = vunpack.c.l.b16 %v287
    %v438 = vunpack.c.h.b16 %v287
    %v439 = vunpack.c.l.b16 %v288
    %v440 = vunpack.c.h.b16 %v288
    %v441 = vunpack.c.l.b16 %v289
    %v442 = vunpack.c.h.b16 %v289
    %v443 = vunpack.c.l.b16 %v290
    %v444 = vunpack.c.h.b16 %v290
    %v445 = vunpack.c.l.b16 %v291
    %v446 = vunpack.c.h.b16 %v291
    %v447 = vunpack.c.l.b16 %v292
    %v448 = vunpack.c.h.b16 %v292
    %v449 = vunpack.c.l.b16 %v293
    %v450 = vunpack.c.h.b16 %v293
    %v451 = vunpack.c.l.b16 %v294
    %v452 = vunpack.c.h.b16 %v294
    %v453 = vunpack.c.l.b16 %v295
    %v454 = vunpack.c.h.b16 %v295
    %v455 = vunpack.c.l.b16 %v296
    %v456 = vunpack.c.h.b16 %v296
    %v457 = vunpack.c.l.b16 %v297
    %v458 = vunpack.c.h.b16 %v297
    %v459 = vunpack.c.l.b16 %v298
    %v460 = vunpack.c.h.b16 %v298
    %v461 = vunpack.c.l.b16 %v299
    %v462 = vunpack.c.h.b16 %v299
    %v463 = vunpack.c.l.b16 %v300
    %v464 = vunpack.c.h.b16 %v300
    %v465 = vunpack.c.l.b16 %v301
    %v466 = vunpack.c.h.b16 %v301
    %v467 = vunpack.c.l.b16 %v302
    %v468 = vunpack.c.h.b16 %v302
    %v469 = vunpack.c.l.b16 %v303
    %v470 = vunpack.c.h.b16 %v303
    %v471 = vunpack.c.l.b16 %v304
    %v472 = vunpack.c.h.b16 %v304
    %v473 = vunpack.c.l.b16 %v305
    %v474 = vunpack.c.h.b16 %v305
    %v475 = vunpack.c.l.b16 %v306
    %v476 = vunpack.c.h.b16 %v306
    %v477 = vunpack.c.l.b16 %v307
    %v478 = vunpack.c.h.b16 %v307
    %v479 = vunpack.c.l.b16 %v308
    %v480 = vunpack.c.h.b16 %v308
    %v481 = vunpack.c.l.b16 %v309
    %v482 = vunpack.c.h.b16 %v309
    %v483 = vunpack.c.l.b16 %v310
    %v484 = vunpack.c.h.b16 %v310
    %v485 = vunpack.c.l.b16 %v311
    %v486 = vunpack.c.h.b16 %v311
    %v487 = vunpack.c.l.b16 %v312
    %v488 = vunpack.c.h.b16 %v312
    %v489 = vunpack.c.l.b16 %v313
    %v490 = vunpack.c.h.b16 %v313
    %v491 = vunpack.c.l.b16 %v314
    %v492 = vunpack.c.h.b16 %v314
    %v493 = vunpack.c.l.b16 %v315
    %v494 = vunpack.c.h.b16 %v315
    %v495 = vunpack.c.l.b16 %v316
    %v496 = vunpack.c.h.b16 %v316
    %v497 = vunpack.c.l.b16 %v317
    %v498 = vunpack.c.h.b16 %v317
    %v499 = vunpack.c.l.b16 %v318
    %v500 = vunpack.c.h.b16 %v318
    %v501 = vunpack.c.l.b16 %v319
    %v502 = vunpack.c.h.b16 %v319
    %v503 = vunpack.c.l.b16 %v320
    %v504 = vunpack.c.h.b16 %v320
    %v505 = vunpack.c.l.b16 %v321
    %v506 = vunpack.c.h.b16 %v321
    %v507 = vunpack.c.l.b16 %v322
    %v508 = vunpack.c.h.b16 %v322
    %v509 = vunpack.c.l.b16 %v323
    %v510 = vunpack.c.h.b16 %v323
    %v511 = vunpack.c.l.b16 %v324
    %v512 = vunpack.c.h.b16 %v324
    %v513 = vunpack.c.l.b16 %v325
    %v514 = vunpack.c.h.b16 %v325
    %v515 = vunpack.c.l.b16 %v326
    %v516 = vunpack.c.h.b16 %v326
    %v517 = vunpack.c.l.b16 %v327
    %v518 = vunpack.c.h.b16 %v327
    %v519 = vunpack.c.l.b16 %v328
    %v520 = vunpack.c.h.b16 %v328
    %v521 = vunpack.c.l.b16 %v329
    %v522 = vunpack.c.h.b16 %v329
    %v523 = vunpack.c.l.b16 %v330
    %v524 = vunpack.c.h.b16 %v330
    %v525 = vunpack.c.l.b16 %v331
    %v526 = vunpack.c.h.b16 %v331
    %v527 = vunpack.c.l.b16 %v332
    %v528 = vunpack.c.h.b16 %v332
    %v529 = vunpack.c.l.b16 %v333
    %v530 = vunpack.c.h.b16 %v333
    %v531 = vunpack.c.l.b16 %v334
    %v532 = vunpack.c.h.b16 %v334
    %v533 = vunpack.c.l.b16 %v335
    %v534 = vunpack.c.h.b16 %v335
    %v535 = vunpack.c.l.b16 %v336
    %v536 = vunpack.c.h.b16 %v336
    %v537 = vunpack.c.l.b16 %v337
    %v538 = vunpack.c.h.b16 %v337
    %v539 = vunpack.c.l.b16 %v338
    %v540 = vunpack.c.h.b16 %v338
    %v541 = vunpack.c.l.b16 %v339
    %v542 = vunpack.c.h.b16 %v339
    %v543 = vunpack.c.l.b16 %v340
    %v544 = vunpack.c.h.b16 %v340
    %v545 = vpack.c.b16 %v419, %v417
    %v546 = vpack.c.b16 %v420, %v418
    %v547 = vpack.c.b16 %v423, %v421
    %v548 = vpack.c.b16 %v424, %v422
    %v549 = vpack.c.b16 %v427, %v425
    %v550 = vpack.c.b16 %v428, %v426
    %v551 = vpack.c.b16 %v431, %v429
    %v552 = vpack.c.b16 %v432, %v430
    %v553 = vpack.c.b16 %v435, %v433
    %v554 = vpack.c.b16 %v436, %v434
    %v555 = vpack.c.b16 %v439, %v437
    %v556 = vpack.c.b16 %v440, %v438
    %v557 = vpack.c.b16 %v443, %v441
    %v558 = vpack.c.b16 %v444, %v442
    %v559 = vpack.c.b16 %v447, %v445
    %v560 = vpack.c.b16 %v448, %v446
    %v561 = vpack.c.b16 %v451, %v449
    %v562 = vpack.c.b16 %v452, %v450
    %v563 = vpack.c.b16 %v455, %v453
    %v564 = vpack.c.b16 %v456, %v454
    %v565 = vpack.c.b16 %v459, %v457
    %v566 = vpack.c.b16 %v460, %v458
    %v567 = vpack.c.b16 %v463, %v461
    %v568 = vpack.c.b16 %v464, %v462
    %v569 = vpack.c.b16 %v467, %v465
    %v570 = vpack.c.b16 %v468, %v466
    %v571 = vpack.c.b16 %v471, %v469
    %v572 = vpack.c.b16 %v472, %v470
    %v573 = vpack.c.b16 %v475, %v473
    %v574 = vpack.c.b16 %v476, %v474
    %v575 = vpack.c.b16 %v479, %v477
    %v576 = vpack.c.b16 %v480, %v478
    %v577 = vpack.c.b16 %v483, %v481
    %v578 = vpack.c.b16 %v484, %v482
    %v579 = vpack.c.b16 %v487, %v485
    %v580 = vpack.c.b16 %v488, %v486
    %v581 = vpack.c.b16 %v491, %v489
    %v582 = vpack.c.b16 %v492, %v490
    %v583 = vpack.c.b16 %v495, %v493
    %v584 = vpack.c.b16 %v496, %v494
    %v585 = vpack.c.b16 %v499, %v497
    %v586 = vpack.c.b16 %v500, %v498
    %v587 = vpack.c.b16 %v503, %v501
    %v588 = vpack.c.b16 %v504, %v502
    %v589 = vpack.c.b16 %v507, %v505
    %v590 = vpack.c.b16 %v508, %v506
    %v591 = vpack.c.b16 %v511, %v509
    %v592 = vpack.c.b16 %v512, %v510
    %v593 = vpack.c.b16 %v515, %v513
    %v594 = vpack.c.b16 %v516, %v514
    %v595 = vpack.c.b16 %v519, %v517
    %v596 = vpack.c.b16 %v520, %v518
    %v597 = vpack.c.b16 %v523, %v521
    %v598 = vpack.c.b16 %v524, %v522
    %v599 = vpack.c.b16 %v527, %v525
    %v600 = vpack.c.b16 %v528, %v526
    %v601 = vpack.c.b16 %v531, %v529
    %v602 = vpack.c.b16 %v532, %v530
    %v603 = vpack.c.b16 %v535, %v533
    %v604 = vpack.c.b16 %v536, %v534
    %v605 = vpack.c.b16 %v539, %v537
    %v606 = vpack.c.b16 %v540, %v538
    %v607 = vpack.c.b16 %v543, %v541
    %v608 = vpack.c.b16 %v544, %v542
    %673 = vmatprep.subr.bf16.mxu0 %v546
    %674 = vmatpush1.bf16.msra.mxu0 %v545
    %675 = vmatprep.subr.bf16.mxu0 %v548
    %676 = vmatpush1.bf16.msra.mxu0 %v547
    %677 = vmatprep.subr.bf16.mxu0 %v550
    %678 = vmatpush1.bf16.msra.mxu0 %v549
    %679 = vmatprep.subr.bf16.mxu0 %v552
    %680 = vmatpush1.bf16.msra.mxu0 %v551
    %681 = vmatprep.subr.bf16.mxu0 %v554
    %682 = vmatpush1.bf16.msra.mxu0 %v553
    %683 = vmatprep.subr.bf16.mxu0 %v556
    %684 = vmatpush1.bf16.msra.mxu0 %v555
    %685 = vmatprep.subr.bf16.mxu0 %v558
    %686 = vmatpush1.bf16.msra.mxu0 %v557
    %687 = vmatprep.subr.bf16.mxu0 %v560
    %688 = vmatpush1.bf16.msra.mxu0 %v559
    %689 = vmatprep.subr.bf16.mxu0 %v562
    %690 = vmatpush1.bf16.msra.mxu0 %v561
    %691 = vmatprep.subr.bf16.mxu0 %v564
    %692 = vmatpush1.bf16.msra.mxu0 %v563
    %693 = vmatprep.subr.bf16.mxu0 %v566
    %694 = vmatpush1.bf16.msra.mxu0 %v565
    %695 = vmatprep.subr.bf16.mxu0 %v568
    %696 = vmatpush1.bf16.msra.mxu0 %v567
    %697 = vmatprep.subr.bf16.mxu0 %v570
    %698 = vmatpush1.bf16.msra.mxu0 %v569
    %699 = vmatprep.subr.bf16.mxu0 %v572
    %700 = vmatpush1.bf16.msra.mxu0 %v571
    %701 = vmatprep.subr.bf16.mxu0 %v574
    %702 = vmatpush1.bf16.msra.mxu0 %v573
    %703 = vmatprep.subr.bf16.mxu0 %v576
    %704 = vmatpush1.bf16.msra.mxu0 %v575
    %705 = vmatprep.mubr.bf16.mxu0 %v274
    %706 = vmatmul.mubr.bf16.gmra.mrb[0].mxu0 %v273
    %v707 = vpop.f32.mrb[0].mxu0
    %v708 = vadd.f32 %v346, %v707
    %v709 = vpop.f32.mrb[0].mxu0
    %v710 = vadd.f32 %v350, %v709
    %v711 = vpop.f32.mrb[0].mxu0
    %v712 = vadd.f32 %v346, %v711
    %v713 = vpop.f32.mrb[0].mxu0
    %v714 = vadd.f32 %v350, %v713
    %715 = vdwg.mxu0
    %716 = vmatprep.subr.bf16.mxu0 %v578
    %717 = vmatpush1.bf16.msra.mxu0 %v577
    %718 = vmatprep.subr.bf16.mxu0 %v580
    %719 = vmatpush1.bf16.msra.mxu0 %v579
    %720 = vmatprep.subr.bf16.mxu0 %v582
    %721 = vmatpush1.bf16.msra.mxu0 %v581
    %722 = vmatprep.subr.bf16.mxu0 %v584
    %723 = vmatpush1.bf16.msra.mxu0 %v583
    %724 = vmatprep.subr.bf16.mxu0 %v586
    %725 = vmatpush1.bf16.msra.mxu0 %v585
    %726 = vmatprep.subr.bf16.mxu0 %v588
    %727 = vmatpush1.bf16.msra.mxu0 %v587
    %728 = vmatprep.subr.bf16.mxu0 %v590
    %729 = vmatpush1.bf16.msra.mxu0 %v589
    %730 = vmatprep.subr.bf16.mxu0 %v592
    %731 = vmatpush1.bf16.msra.mxu0 %v591
    %732 = vmatprep.subr.bf16.mxu0 %v594
    %733 = vmatpush1.bf16.msra.mxu0 %v593
    %734 = vmatprep.subr.bf16.mxu0 %v596
    %735 = vmatpush1.bf16.msra.mxu0 %v595
    %736 = vmatprep.subr.bf16.mxu0 %v598
    %737 = vmatpush1.bf16.msra.mxu0 %v597
    %738 = vmatprep.subr.bf16.mxu0 %v600
    %739 = vmatpush1.bf16.msra.mxu0 %v599
    %740 = vmatprep.subr.bf16.mxu0 %v602
    %741 = vmatpush1.bf16.msra.mxu0 %v601
    %742 = vmatprep.subr.bf16.mxu0 %v604
    %743 = vmatpush1.bf16.msra.mxu0 %v603
    %744 = vmatprep.subr.bf16.mxu0 %v606
    %745 = vmatpush1.bf16.msra.mxu0 %v605
    %746 = vmatprep.subr.bf16.mxu0 %v608
    %747 = vmatpush1.bf16.msra.mxu0 %v607
    %748 = vmatprep.mubr.bf16.mxu0 %v276
    %749 = vmatmul.mubr.bf16.gmra.mrb[0].mxu0 %v275
    %v750 = vpop.f32.mrb[0].mxu0
    %v751 = vadd.f32 %v708, %v750
    %v752 = vpop.f32.mrb[0].mxu0
    %v753 = vadd.f32 %v710, %v752
    %v754 = vpop.f32.mrb[0].mxu0
    %v755 = vadd.f32 %v712, %v754
    %v756 = vpop.f32.mrb[0].mxu0
    %v757 = vadd.f32 %v714, %v756
    %758 = vdwg.mxu0
    %v759 = vmax.f32 %v751, 0.0
    %v760 = vmax.f32 %v753, 0.0
    %v761 = vmax.f32 %v755, 0.0
    %v762 = vmax.f32 %v757, 0.0
    %v763 = vld [vmem:[%s5] sm:$0x3]
    %v765 = vlaneseq
    %v766 = vshrl.u32 %v765, 7
    %v767 = vsub.s32 0, %v766
    %v768 = vrot.slane %v763, %v767
    %v769 = vlaneseq
    %v770 = vshrl.u32 %v769, 7
    %v771 = vsub.s32 1, %v770
    %v772 = vrot.slane %v763, %v771
    %v775 = vmul.f32 %v759, %v768
    %v776 = vmul.f32 %v760, %v772
    %v777 = vmul.f32 %v761, %v768
    %v778 = vmul.f32 %v762, %v772
    %v779 = vadd.f32 %v775, %v776
    %780 = vadd.xlane.f32.xlu0 %v779
    %v781 = vpop.xlane.xlu0 %780
    %v782 = vadd.f32 %v777, %v778
    %783 = vadd.xlane.f32.xlu0 %v782
    %v784 = vpop.xlane.xlu0 %783
    %s785 = sld [smem:[#allocation2]]
    %v786 = vstv %s785
    %v787 = vadd.f32 %v781, %v786
    %v788 = vadd.f32 %v784, %v786
    %v791 = vlaneseq
    %v792 = vand.u32 %v791, 127
    %v793 = vlaneseq
    %v794 = vshrl.u32 %v793, 7
    %v795 = vsub.s32 %v792, %v794
    %v796 = vrot.slane %v787, %v795
    %v797 = vadd.s32 %v792, 4294967288
    %v798 = vlaneseq
    %v799 = vshrl.u32 %v798, 7
    %v800 = vsub.s32 %v797, %v799
    %v801 = vrot.slane %v788, %v800
    %vm802 = vcmask 130112
    %v803 = vsel %vm802, %v801, %v796
    %vm805 = vcmask 122880
    %806 = vst.msk [vmem:[#allocation9] sm:$0x1] %vm805, %v803
    // Predicated region
    $region42: #{value_net_forward.1} parent=1 // pred_check
      _
    $region43: #{value_net_forward.1} parent=1 // pred_check_branch
      %808 = sbr.rel (0) target = $region45
    $region44: #{value_net_forward.1} parent=1 // pred_region
      %s810 = ssub.s32 16, 16
      %811 = vsyncadd [#allocation5], %s810
      %s813 = sshll.u32 [#allocation9], 4
      %s814 = int_to_ptr.vmem [resolvable:$true] %s813
      %816 = dma.vmem_to_hbm [thread:$0]  %s814, 16, %s7, [#allocation5]
    $region45: #{value_net_forward.1} parent=1 // pred_fallthru
      _
    // Predicated region
    $region46: #{value_net_forward.1} parent=1 // pred_check
      _
    $region47: #{value_net_forward.1} parent=1 // pred_check_branch
      %818 = sbr.rel (0) target = $region49
    $region48: #{value_net_forward.1} parent=1 // pred_region
      %819 = dma.done [#allocation5], 16
    $region49: #{value_net_forward.1} parent=1 // pred_fallthru
      _
    %820 = vsyncpa [#allocation4], 1
    %821 = vsyncpa [#allocation7], 1
    %822 = vsyncpa [#allocation5], 1

</llo_original>
